<compile_context>
chip_gen: v7x
topology: tpu7x:2x2x1
jax: 0.10.0
libtpu: 0.0.40
codegen_flags: <defaults>
</compile_context>

<pallas_src>
import functools

import jax
import jax.numpy as jnp
from jax import lax
from jax.experimental import pallas as pl
from jax.experimental.pallas import tpu as pltpu


def _fused_neck_kernel(x_ref, w1_ref, b1_ref, w2_ref, b2_ref,
                       kmask_ref, tmask_ref, o_ref, *, K, W_img, N):
    """One batch tile (Bt images fused on the lane axis) per grid step.

    x_ref     : (Cin_p , N) f32          activations, N = Bt*H*W lanes
    w1/w2_ref : (Cout_p, K*K*Cin_p) bf16 flattened conv weights
    b1/b2_ref : (Cout_p, 1) f32
    kmask_ref : (K*K, N) f32             0/1 'same'-padding boundary masks
    tmask_ref : (1, N)  f32              0/1 time mask (row < seq_len per image)
    """
    pad = (K - 1) // 2
    kmask = kmask_ref[...]                               # resident constants
    tmask = tmask_ref[...]                               # (1, N)

    def conv(act, w_ref):
        # Patch matrix built as a VALUE (no VMEM scratch round trip): K*K
        # lane-shifted + boundary-masked slabs concatenated on sublanes, cast
        # to bf16 at the MXU boundary, one matmul with f32 accumulation.
        slabs = []
        for kh in range(K):
            for kw in range(K):
                t = kh * K + kw
                s = (kh - pad) * W_img + (kw - pad)      # flat lane offset
                shifted = act if s == 0 else pltpu.roll(act, (-s) % N, axis=1)
                slabs.append(shifted * kmask[t:t + 1, :])
        patch = jnp.concatenate(slabs, axis=0).astype(jnp.bfloat16)
        return jnp.dot(w_ref[...], patch, preferred_element_type=jnp.float32)

    # ---- layer 1: MaskedLayer(Conv3x3 + ReLU) -------------------------------
    a1 = conv(x_ref[...], w1_ref)                        # (Cmid_p, N) f32
    a1 = jnp.maximum(a1 + b1_ref[...], 0.0) * tmask      # bias, ReLU, time mask

    # ---- layer 2: intermediate stays in VMEM --------------------------------
    a2 = conv(a1, w2_ref)                                # (Cout_p, N) f32
    a2 = jnp.maximum(a2 + b2_ref[...], 0.0) * tmask

    o_ref[...] = a2.astype(o_ref.dtype)                  # lane-dense store


def _pad8(c):
    return -(-c // 8) * 8


def _prep_conv_params(w, b, cin_p, cout_p):
    """HWIO (K,K,Cin,Cout) -> (cout_p, K*K*cin_p) bf16 weights, (cout_p,1) f32 bias."""
    kh, kw, cin, cout = w.shape
    wp = jnp.zeros((kh * kw, cin_p, cout_p), jnp.float32)
    wp = wp.at[:, :cin, :cout].set(w.reshape(kh * kw, cin, cout))
    wf = wp.reshape(kh * kw * cin_p, cout_p).T.astype(jnp.bfloat16)
    bp = jnp.zeros((cout_p, 1), jnp.float32).at[:cout, 0].set(b)
    return wf, bp


def _pick_batch_tile(B):
    """Largest divisor of B that still leaves >= 2 grid steps (v7x: 2 TCs)."""
    best = 1
    for d in range(1, B + 1):
        if B % d == 0 and B // d >= 2:
            best = d
    return best


def neck_forward(x_nchw, seq_lens, params):
    """Neck.forward for the synthesized 2-layer neck.  x is NCHW like PyTorch."""
    (w1, b1), (w2, b2) = params
    B, Cin, H, W = x_nchw.shape
    K = w1.shape[0]
    Cmid, Cout = w1.shape[-1], w2.shape[-1]
    HW = H * W

    Cin_p, Cmid_p, Cout_p = _pad8(Cin), _pad8(Cmid), _pad8(Cout)
    Bt = _pick_batch_tile(B)
    N = Bt * HW                                   # lanes per grid step
    grid = B // Bt

    # ---- layout plumbing (wrapper side, once) -------------------------------
    # channel-major activations, all images fused on the flat lane axis
    x_flat = jnp.transpose(x_nchw, (1, 0, 2, 3)).reshape(Cin, B * HW)
    x_flat = jnp.pad(x_flat, ((0, Cin_p - Cin), (0, 0)))        # (Cin_p, B*HW)

    w1f, b1c = _prep_conv_params(w1, b1, Cin_p, Cmid_p)
    w2f, b2c = _prep_conv_params(w2, b2, Cmid_p, Cout_p)

    # per-tap 'same'-padding boundary masks (shape-only; constant-folded)
    pad = (K - 1) // 2
    pos = jnp.arange(HW, dtype=jnp.int32)
    row, col = pos // W, pos % W
    kmask = jnp.stack([
        ((row + (kh - pad) >= 0) & (row + (kh - pad) < H) &
         (col + (kw - pad) >= 0) & (col + (kw - pad) < W))
        for kh in range(K) for kw in range(K)
    ]).astype(jnp.float32)                                       # (K*K, HW)
    kmask = jnp.tile(kmask, (1, Bt))                             # (K*K, N)

    # per-lane time mask from seq_lens (MaskedLayer dim=2, mask_value=0.0)
    tmask = (row[None, :] < seq_lens[:, None]).astype(jnp.float32)
    tmask = tmask.reshape(1, B * HW)

    kernel = functools.partial(_fused_neck_kernel, K=K, W_img=W, N=N)

    out_flat = pl.pallas_call(
        kernel,
        out_shape=jax.ShapeDtypeStruct((Cout_p, B * HW), jnp.float32),
        grid_spec=pltpu.PrefetchScalarGridSpec(
            num_scalar_prefetch=0,
            grid=(grid,),
            in_specs=[
                pl.BlockSpec((Cin_p, N), lambda i: (0, i)),                # x
                pl.BlockSpec((Cmid_p, K * K * Cin_p), lambda i: (0, 0)),   # w1
                pl.BlockSpec((Cmid_p, 1), lambda i: (0, 0)),               # b1
                pl.BlockSpec((Cout_p, K * K * Cmid_p), lambda i: (0, 0)),  # w2
                pl.BlockSpec((Cout_p, 1), lambda i: (0, 0)),               # b2
                pl.BlockSpec((K * K, N), lambda i: (0, 0)),                # kmask
                pl.BlockSpec((1, N), lambda i: (0, i)),                    # tmask
            ],
            out_specs=pl.BlockSpec((Cout_p, N), lambda i: (0, i)),
        ),
        compiler_params=pltpu.CompilerParams(
            dimension_semantics=("parallel",)),   # batch tiles shard across TCs
    )(x_flat, w1f, b1c, w2f, b2c, kmask, tmask)

    out = out_flat.reshape(Cout_p, B, H, W).transpose(1, 0, 2, 3)[:, :Cout]
    # stride-1 convolutions: sequence lengths are unchanged.
    return out, seq_lens


def _reference_forward(x_nchw, seq_lens, params):
    """Pure-JAX f32 reference of the same semantics (sanity check)."""
    x = jnp.transpose(x_nchw, (0, 2, 3, 1))
    for (w, b) in params:
        y = lax.conv_general_dilated(
            x, w, window_strides=(1, 1), padding="SAME",
            dimension_numbers=("NHWC", "HWIO", "NHWC"))
        y = jnp.maximum(y + b[None, None, None, :], 0.0)
        t_ids = jnp.arange(y.shape[1])[None, :, None, None]
        y = jnp.where(t_ids < seq_lens[:, None, None, None], y, 0.0)
        x = y
    return jnp.transpose(x, (0, 3, 1, 2)), seq_lens


if __name__ == "__main__":
    key = jax.random.PRNGKey(0)
    B, Cin, T, F = 4, 4, 16, 16      # NCHW: (batch, channels, time, freq)
    Cmid, Cout = 8, 8
    K = 3

    k_x, k_w0, k_b0, k_w1, k_b1 = jax.random.split(key, 5)
    x = jax.random.normal(k_x, (B, Cin, T, F), dtype=jnp.float32)
    seq_lens = jnp.array([16, 10, 7, 13], dtype=jnp.int32)

    # Deterministic synthetic parameters (two conv layers of the neck), HWIO.
    params = [
        (0.1 * jax.random.normal(k_w0, (K, K, Cin, Cmid), dtype=jnp.float32),
         0.1 * jax.random.normal(k_b0, (Cmid,), dtype=jnp.float32)),
        (0.1 * jax.random.normal(k_w1, (K, K, Cmid, Cout), dtype=jnp.float32),
         0.1 * jax.random.normal(k_b1, (Cout,), dtype=jnp.float32)),
    ]

    out, out_lens = jax.jit(neck_forward)(x, seq_lens, params)
    out = jax.block_until_ready(out)

    ref, ref_lens = _reference_forward(x, seq_lens, params)
    assert out.shape == (B, Cout, T, F), out.shape
    max_err = float(jnp.max(jnp.abs(out - ref)))
    # bf16 MXU operands with f32 accumulation -> loosened tolerance vs f32 ref.
    assert jnp.allclose(out, ref, atol=2e-2, rtol=2e-2), max_err
    assert jnp.array_equal(out_lens, ref_lens)

    print("KERNEL_OK")
</pallas_src>

<mosaic_0001>
module attributes {stable_mosaic.version = 11 : i64} {
  func.func @_fused_neck_kernel(%arg0: i32, %arg1: memref<8x512xf32, #tpu.memory_space<vmem>>, %arg2: memref<8x72xbf16, #tpu.memory_space<vmem>>, %arg3: memref<8x1xf32, #tpu.memory_space<vmem>>, %arg4: memref<8x72xbf16, #tpu.memory_space<vmem>>, %arg5: memref<8x1xf32, #tpu.memory_space<vmem>>, %arg6: memref<9x512xf32, #tpu.memory_space<vmem>>, %arg7: memref<1x512xf32, #tpu.memory_space<vmem>>, %arg8: memref<8x512xf32, #tpu.memory_space<vmem>>) attributes {dimension_semantics = [#tpu.dimension_semantics<parallel>], iteration_bounds = array<i64: 2>, scalar_prefetch = 0 : i64, scratch_operands = 0 : i64, tpu.core_type = #tpu.core_type<tc>, window_params = [{transform_indices = @transform_0, window_bounds = array<i64: 8, 512>}, {pipeline_mode = #tpu.pipeline_mode<synchronous>, transform_indices = @transform_1, window_bounds = array<i64: 8, 72>}, {pipeline_mode = #tpu.pipeline_mode<synchronous>, transform_indices = @transform_2, window_bounds = array<i64: 8, 1>}, {pipeline_mode = #tpu.pipeline_mode<synchronous>, transform_indices = @transform_3, window_bounds = array<i64: 8, 72>}, {pipeline_mode = #tpu.pipeline_mode<synchronous>, transform_indices = @transform_4, window_bounds = array<i64: 8, 1>}, {pipeline_mode = #tpu.pipeline_mode<synchronous>, transform_indices = @transform_5, window_bounds = array<i64: 9, 512>}, {transform_indices = @transform_6, window_bounds = array<i64: 1, 512>}, {transform_indices = @transform_7, window_bounds = array<i64: 8, 512>}]} {
    %c0 = arith.constant 0 : index
    %c0_0 = arith.constant 0 : index
    %0 = vector.load %arg6[%c0, %c0_0] : memref<9x512xf32, #tpu.memory_space<vmem>>, vector<9x512xf32>
    %c0_1 = arith.constant 0 : index
    %c0_2 = arith.constant 0 : index
    %1 = vector.load %arg7[%c0_1, %c0_2] : memref<1x512xf32, #tpu.memory_space<vmem>>, vector<1x512xf32>
    %c0_3 = arith.constant 0 : index
    %c0_4 = arith.constant 0 : index
    %2 = vector.load %arg1[%c0_3, %c0_4] : memref<8x512xf32, #tpu.memory_space<vmem>>, vector<8x512xf32>
    %c17_i32 = arith.constant 17 : i32
    %3 = tpu.dynamic_rotate %2 by %c17_i32 dim 1 : vector<8x512xf32>, i32 -> vector<8x512xf32>
    %4 = vector.extract_strided_slice %0 {offsets = [0, 0], sizes = [1, 512], strides = [1, 1]} : vector<9x512xf32> to vector<1x512xf32>
    %5 = vector.broadcast %4 : vector<1x512xf32> to vector<8x512xf32>
    %6 = arith.mulf %3, %5 : vector<8x512xf32>
    %c16_i32 = arith.constant 16 : i32
    %7 = tpu.dynamic_rotate %2 by %c16_i32 dim 1 : vector<8x512xf32>, i32 -> vector<8x512xf32>
    %8 = vector.extract_strided_slice %0 {offsets = [1, 0], sizes = [1, 512], strides = [1, 1]} : vector<9x512xf32> to vector<1x512xf32>
    %9 = vector.broadcast %8 : vector<1x512xf32> to vector<8x512xf32>
    %10 = arith.mulf %7, %9 : vector<8x512xf32>
    %c15_i32 = arith.constant 15 : i32
    %11 = tpu.dynamic_rotate %2 by %c15_i32 dim 1 : vector<8x512xf32>, i32 -> vector<8x512xf32>
    %12 = vector.extract_strided_slice %0 {offsets = [2, 0], sizes = [1, 512], strides = [1, 1]} : vector<9x512xf32> to vector<1x512xf32>
    %13 = vector.broadcast %12 : vector<1x512xf32> to vector<8x512xf32>
    %14 = arith.mulf %11, %13 : vector<8x512xf32>
    %c1_i32 = arith.constant 1 : i32
    %15 = tpu.dynamic_rotate %2 by %c1_i32 dim 1 : vector<8x512xf32>, i32 -> vector<8x512xf32>
    %16 = vector.extract_strided_slice %0 {offsets = [3, 0], sizes = [1, 512], strides = [1, 1]} : vector<9x512xf32> to vector<1x512xf32>
    %17 = vector.broadcast %16 : vector<1x512xf32> to vector<8x512xf32>
    %18 = arith.mulf %15, %17 : vector<8x512xf32>
    %19 = vector.extract_strided_slice %0 {offsets = [4, 0], sizes = [1, 512], strides = [1, 1]} : vector<9x512xf32> to vector<1x512xf32>
    %20 = vector.broadcast %19 : vector<1x512xf32> to vector<8x512xf32>
    %21 = arith.mulf %2, %20 : vector<8x512xf32>
    %c511_i32 = arith.constant 511 : i32
    %22 = tpu.dynamic_rotate %2 by %c511_i32 dim 1 : vector<8x512xf32>, i32 -> vector<8x512xf32>
    %23 = vector.extract_strided_slice %0 {offsets = [5, 0], sizes = [1, 512], strides = [1, 1]} : vector<9x512xf32> to vector<1x512xf32>
    %24 = vector.broadcast %23 : vector<1x512xf32> to vector<8x512xf32>
    %25 = arith.mulf %22, %24 : vector<8x512xf32>
    %c497_i32 = arith.constant 497 : i32
    %26 = tpu.dynamic_rotate %2 by %c497_i32 dim 1 : vector<8x512xf32>, i32 -> vector<8x512xf32>
    %27 = vector.extract_strided_slice %0 {offsets = [6, 0], sizes = [1, 512], strides = [1, 1]} : vector<9x512xf32> to vector<1x512xf32>
    %28 = vector.broadcast %27 : vector<1x512xf32> to vector<8x512xf32>
    %29 = arith.mulf %26, %28 : vector<8x512xf32>
    %c496_i32 = arith.constant 496 : i32
    %30 = tpu.dynamic_rotate %2 by %c496_i32 dim 1 : vector<8x512xf32>, i32 -> vector<8x512xf32>
    %31 = vector.extract_strided_slice %0 {offsets = [7, 0], sizes = [1, 512], strides = [1, 1]} : vector<9x512xf32> to vector<1x512xf32>
    %32 = vector.broadcast %31 : vector<1x512xf32> to vector<8x512xf32>
    %33 = arith.mulf %30, %32 : vector<8x512xf32>
    %c495_i32 = arith.constant 495 : i32
    %34 = tpu.dynamic_rotate %2 by %c495_i32 dim 1 : vector<8x512xf32>, i32 -> vector<8x512xf32>
    %35 = vector.extract_strided_slice %0 {offsets = [8, 0], sizes = [1, 512], strides = [1, 1]} : vector<9x512xf32> to vector<1x512xf32>
    %36 = vector.broadcast %35 : vector<1x512xf32> to vector<8x512xf32>
    %37 = arith.mulf %34, %36 : vector<8x512xf32>
    %38 = tpu.concatenate %6, %10, %14, %18, %21, %25, %29, %33, %37 in 0 : vector<8x512xf32>, vector<8x512xf32>, vector<8x512xf32>, vector<8x512xf32>, vector<8x512xf32>, vector<8x512xf32>, vector<8x512xf32>, vector<8x512xf32>, vector<8x512xf32> -> vector<72x512xf32>
    %39 = arith.truncf %38 : vector<72x512xf32> to vector<72x512xbf16>
    %c0_5 = arith.constant 0 : index
    %c0_6 = arith.constant 0 : index
    %40 = vector.load %arg2[%c0_5, %c0_6] : memref<8x72xbf16, #tpu.memory_space<vmem>>, vector<8x72xbf16>
    %cst = arith.constant dense<0.000000e+00> : vector<8x512xf32>
    %41 = tpu.matmul %40, %39, %cst {dimension_numbers = #tpu.dot_dimension_numbers<[1], [0], [0], [1], [0, 0, 1, 1], [], []>} : vector<8x72xbf16>, vector<72x512xbf16>, vector<8x512xf32> -> vector<8x512xf32>
    %c0_7 = arith.constant 0 : index
    %c0_8 = arith.constant 0 : index
    %42 = vector.load %arg3[%c0_7, %c0_8] : memref<8x1xf32, #tpu.memory_space<vmem>>, vector<8x1xf32>
    %43 = vector.broadcast %42 : vector<8x1xf32> to vector<8x512xf32>
    %44 = arith.addf %41, %43 : vector<8x512xf32>
    %cst_9 = arith.constant 0.000000e+00 : f32
    %45 = vector.broadcast %cst_9 : f32 to vector<8x512xf32>
    %46 = arith.maximumf %44, %45 : vector<8x512xf32>
    %47 = vector.broadcast %1 : vector<1x512xf32> to vector<8x512xf32>
    %48 = arith.mulf %46, %47 : vector<8x512xf32>
    %c17_i32_10 = arith.constant 17 : i32
    %49 = tpu.dynamic_rotate %48 by %c17_i32_10 dim 1 : vector<8x512xf32>, i32 -> vector<8x512xf32>
    %50 = vector.extract_strided_slice %0 {offsets = [0, 0], sizes = [1, 512], strides = [1, 1]} : vector<9x512xf32> to vector<1x512xf32>
    %51 = vector.broadcast %50 : vector<1x512xf32> to vector<8x512xf32>
    %52 = arith.mulf %49, %51 : vector<8x512xf32>
    %c16_i32_11 = arith.constant 16 : i32
    %53 = tpu.dynamic_rotate %48 by %c16_i32_11 dim 1 : vector<8x512xf32>, i32 -> vector<8x512xf32>
    %54 = vector.extract_strided_slice %0 {offsets = [1, 0], sizes = [1, 512], strides = [1, 1]} : vector<9x512xf32> to vector<1x512xf32>
    %55 = vector.broadcast %54 : vector<1x512xf32> to vector<8x512xf32>
    %56 = arith.mulf %53, %55 : vector<8x512xf32>
    %c15_i32_12 = arith.constant 15 : i32
    %57 = tpu.dynamic_rotate %48 by %c15_i32_12 dim 1 : vector<8x512xf32>, i32 -> vector<8x512xf32>
    %58 = vector.extract_strided_slice %0 {offsets = [2, 0], sizes = [1, 512], strides = [1, 1]} : vector<9x512xf32> to vector<1x512xf32>
    %59 = vector.broadcast %58 : vector<1x512xf32> to vector<8x512xf32>
    %60 = arith.mulf %57, %59 : vector<8x512xf32>
    %c1_i32_13 = arith.constant 1 : i32
    %61 = tpu.dynamic_rotate %48 by %c1_i32_13 dim 1 : vector<8x512xf32>, i32 -> vector<8x512xf32>
    %62 = vector.extract_strided_slice %0 {offsets = [3, 0], sizes = [1, 512], strides = [1, 1]} : vector<9x512xf32> to vector<1x512xf32>
    %63 = vector.broadcast %62 : vector<1x512xf32> to vector<8x512xf32>
    %64 = arith.mulf %61, %63 : vector<8x512xf32>
    %65 = vector.extract_strided_slice %0 {offsets = [4, 0], sizes = [1, 512], strides = [1, 1]} : vector<9x512xf32> to vector<1x512xf32>
    %66 = vector.broadcast %65 : vector<1x512xf32> to vector<8x512xf32>
    %67 = arith.mulf %48, %66 : vector<8x512xf32>
    %c511_i32_14 = arith.constant 511 : i32
    %68 = tpu.dynamic_rotate %48 by %c511_i32_14 dim 1 : vector<8x512xf32>, i32 -> vector<8x512xf32>
    %69 = vector.extract_strided_slice %0 {offsets = [5, 0], sizes = [1, 512], strides = [1, 1]} : vector<9x512xf32> to vector<1x512xf32>
    %70 = vector.broadcast %69 : vector<1x512xf32> to vector<8x512xf32>
    %71 = arith.mulf %68, %70 : vector<8x512xf32>
    %c497_i32_15 = arith.constant 497 : i32
    %72 = tpu.dynamic_rotate %48 by %c497_i32_15 dim 1 : vector<8x512xf32>, i32 -> vector<8x512xf32>
    %73 = vector.extract_strided_slice %0 {offsets = [6, 0], sizes = [1, 512], strides = [1, 1]} : vector<9x512xf32> to vector<1x512xf32>
    %74 = vector.broadcast %73 : vector<1x512xf32> to vector<8x512xf32>
    %75 = arith.mulf %72, %74 : vector<8x512xf32>
    %c496_i32_16 = arith.constant 496 : i32
    %76 = tpu.dynamic_rotate %48 by %c496_i32_16 dim 1 : vector<8x512xf32>, i32 -> vector<8x512xf32>
    %77 = vector.extract_strided_slice %0 {offsets = [7, 0], sizes = [1, 512], strides = [1, 1]} : vector<9x512xf32> to vector<1x512xf32>
    %78 = vector.broadcast %77 : vector<1x512xf32> to vector<8x512xf32>
    %79 = arith.mulf %76, %78 : vector<8x512xf32>
    %c495_i32_17 = arith.constant 495 : i32
    %80 = tpu.dynamic_rotate %48 by %c495_i32_17 dim 1 : vector<8x512xf32>, i32 -> vector<8x512xf32>
    %81 = vector.extract_strided_slice %0 {offsets = [8, 0], sizes = [1, 512], strides = [1, 1]} : vector<9x512xf32> to vector<1x512xf32>
    %82 = vector.broadcast %81 : vector<1x512xf32> to vector<8x512xf32>
    %83 = arith.mulf %80, %82 : vector<8x512xf32>
    %84 = tpu.concatenate %52, %56, %60, %64, %67, %71, %75, %79, %83 in 0 : vector<8x512xf32>, vector<8x512xf32>, vector<8x512xf32>, vector<8x512xf32>, vector<8x512xf32>, vector<8x512xf32>, vector<8x512xf32>, vector<8x512xf32>, vector<8x512xf32> -> vector<72x512xf32>
    %85 = arith.truncf %84 : vector<72x512xf32> to vector<72x512xbf16>
    %c0_18 = arith.constant 0 : index
    %c0_19 = arith.constant 0 : index
    %86 = vector.load %arg4[%c0_18, %c0_19] : memref<8x72xbf16, #tpu.memory_space<vmem>>, vector<8x72xbf16>
    %cst_20 = arith.constant dense<0.000000e+00> : vector<8x512xf32>
    %87 = tpu.matmul %86, %85, %cst_20 {dimension_numbers = #tpu.dot_dimension_numbers<[1], [0], [0], [1], [0, 0, 1, 1], [], []>} : vector<8x72xbf16>, vector<72x512xbf16>, vector<8x512xf32> -> vector<8x512xf32>
    %c0_21 = arith.constant 0 : index
    %c0_22 = arith.constant 0 : index
    %88 = vector.load %arg5[%c0_21, %c0_22] : memref<8x1xf32, #tpu.memory_space<vmem>>, vector<8x1xf32>
    %89 = vector.broadcast %88 : vector<8x1xf32> to vector<8x512xf32>
    %90 = arith.addf %87, %89 : vector<8x512xf32>
    %cst_23 = arith.constant 0.000000e+00 : f32
    %91 = vector.broadcast %cst_23 : f32 to vector<8x512xf32>
    %92 = arith.maximumf %90, %91 : vector<8x512xf32>
    %93 = vector.broadcast %1 : vector<1x512xf32> to vector<8x512xf32>
    %94 = arith.mulf %92, %93 : vector<8x512xf32>
    %c0_24 = arith.constant 0 : index
    %c0_25 = arith.constant 0 : index
    %95 = vector.load %arg8[%c0_24, %c0_25] : memref<8x512xf32, #tpu.memory_space<vmem>>, vector<8x512xf32>
    tpu.vector_store %arg8[%c0_24, %c0_25], %94 {strides = array<i32>} : memref<8x512xf32, #tpu.memory_space<vmem>>, vector<8x512xf32>,
    return
  }
  func.func @transform_0(%arg0: i32) -> (i32, i32) {
    %c0_i32 = arith.constant 0 : i32
    %c0_i32_0 = arith.constant 0 : i32
    return %c0_i32, %arg0 : i32, i32
  }
  func.func @transform_1(%arg0: i32) -> (i32, i32) {
    %c0_i32 = arith.constant 0 : i32
    %c0_i32_0 = arith.constant 0 : i32
    %c0_i32_1 = arith.constant 0 : i32
    return %c0_i32, %c0_i32_0 : i32, i32
  }
  func.func @transform_2(%arg0: i32) -> (i32, i32) {
    %c0_i32 = arith.constant 0 : i32
    %c0_i32_0 = arith.constant 0 : i32
    %c0_i32_1 = arith.constant 0 : i32
    return %c0_i32, %c0_i32_0 : i32, i32
  }
  func.func @transform_3(%arg0: i32) -> (i32, i32) {
    %c0_i32 = arith.constant 0 : i32
    %c0_i32_0 = arith.constant 0 : i32
    %c0_i32_1 = arith.constant 0 : i32
    return %c0_i32, %c0_i32_0 : i32, i32
  }
  func.func @transform_4(%arg0: i32) -> (i32, i32) {
    %c0_i32 = arith.constant 0 : i32
    %c0_i32_0 = arith.constant 0 : i32
    %c0_i32_1 = arith.constant 0 : i32
    return %c0_i32, %c0_i32_0 : i32, i32
  }
  func.func @transform_5(%arg0: i32) -> (i32, i32) {
    %c0_i32 = arith.constant 0 : i32
    %c0_i32_0 = arith.constant 0 : i32
    %c0_i32_1 = arith.constant 0 : i32
    return %c0_i32, %c0_i32_0 : i32, i32
  }
  func.func @transform_6(%arg0: i32) -> (i32, i32) {
    %c0_i32 = arith.constant 0 : i32
    %c0_i32_0 = arith.constant 0 : i32
    return %c0_i32, %arg0 : i32, i32
  }
  func.func @transform_7(%arg0: i32) -> (i32, i32) {
    %c0_i32 = arith.constant 0 : i32
    %c0_i32_0 = arith.constant 0 : i32
    return %c0_i32, %arg0 : i32, i32
  }
}

</mosaic_0001>

<llo_original>
// kernel: neck_forward.1
$region0: #{neck_forward.1}
  #allocation0 [shape = 'u32[]', space=smem, size = 0x4, offset = 0x4, fixed_abs, tag = 'smem constant byte address 0x4 - core index']
  #allocation1 [shape = 'u32[144,128]{1,0:T(1,128)}', space=vmem, size = 0x12000, scoped, tag = 'internal scratch']
  %s0 = inlined_call_operand.vmem [shape: f32[8,1024], index: 0, kind: input, shape index: {}]
  %s1 = inlined_call_operand.vmem [shape: bf16[8,72], index: 1, kind: input, shape index: {}]
  %s2 = inlined_call_operand.vmem [shape: f32[8,1], index: 2, kind: input, shape index: {}]
  %s3 = inlined_call_operand.vmem [shape: bf16[8,72], index: 3, kind: input, shape index: {}]
  %s4 = inlined_call_operand.vmem [shape: f32[8,1], index: 4, kind: input, shape index: {}]
  %s5 = inlined_call_operand.vmem [shape: f32[9,512], index: 5, kind: input, shape index: {}]
  %s6 = inlined_call_operand.vmem [shape: f32[1,1024], index: 6, kind: input, shape index: {}]
  %s7 = inlined_call_operand.vmem [shape: f32[8,1024], index: 7, kind: output, shape index: {}]
  %s8 = sld [smem:[#allocation0]]
  $region61: #{neck_forward.1} parent=0
    _
  %s10 = ssub.s32 1, %s8
  %s11 = scalar_select 0, %s10, %s8
  loop: start=0, step=1, limit=4
  $region2: #{neck_forward.1} parent=0 // loop_pre_header
    _
  $region3: #{neck_forward.1} parent=0 // loop_header
    %s13 = sphi 0, %s17
    %p14 = scmp.ge.s32.totalorder %s13, 4
    %s23 = sphi 0, %s25
    %s26 = sphi 0, %s23
    %s27 = sphi 0, %s26
    %s43 = sphi 0, %s27
    %s47 = sphi 0, %s47
    %s49 = sphi 0, %s47
    %s50 = sphi 0, %s49
    %s64 = sphi 0, %s50
    %s68 = sphi 0, %s68
    %s70 = sphi 0, %s68
    %s71 = sphi 0, %s70
    %s85 = sphi 0, %s71
    %s89 = sphi 0, %s89
    %s91 = sphi 0, %s89
    %s92 = sphi 0, %s91
    %s106 = sphi 0, %s92
    %s110 = sphi 0, %s110
    %s112 = sphi 0, %s110
    %s113 = sphi 0, %s112
    %s127 = sphi 0, %s113
    %s131 = sphi 0, %s131
    %s133 = sphi 0, %s131
    %s134 = sphi 0, %s133
    %s148 = sphi 0, %s134
    %s154 = sphi 0, %s156
    %s157 = sphi 0, %s154
    %s158 = sphi 0, %s157
    %s174 = sphi 0, %s158
    %s180 = sphi 0, %s182
    %s183 = sphi 0, %s180
    %s184 = sphi 0, %s183
    %s200 = sphi 0, %s184
  $region4: #{neck_forward.1} parent=0 // loop_header_branch
    %16 = sbr.rel (%p14) target = $region8
  $region5: #{neck_forward.1} parent=0 // loop_body
    %s18 = ssub.s32 %s13, 1
    %s19 = ssub.s32 %s13, 2
    %s20 = sadd.s32 %s13, 1
    %s21 = ssub.s32 %s13, %s20
    %p22 = scmp.eq.s32.totalorder %s21, 0
    %s24 = sadd.s32 %s23, 1
    %s25 = scalar_select %p22, %s23, %s24
    %p28 = pneg %p22
    %p29 = scmp.eq.s32.totalorder %s13, 1
    %p30 = por %p28, %p29
    %p31 = scmp.ne.s32.totalorder %s23, %s26
    %p32 = scmp.eq.s32.totalorder %s13, 0
    %p33 = por %p31, %p32
    %p34 = scmp.ne.s32.totalorder %s23, %s26
    %p35 = scmp.eq.s32.totalorder %s18, 1
    %p36 = por %p34, %p35
    %p37 = scmp.ne.s32.totalorder %s26, %s27
    %p38 = scmp.eq.s32.totalorder %s18, 0
    %p39 = por %p37, %p38
    %p40 = scmp.ne.s32.totalorder %s26, %s27
    %p41 = scmp.eq.s32.totalorder %s19, 1
    %p42 = por %p40, %p41
    %p44 = scmp.ne.s32.totalorder %s27, %s43
    %p45 = scmp.eq.s32.totalorder %s19, 0
    %p46 = por %p44, %p45
    %s48 = sadd.s32 %s47, 1
    %p51 = scmp.eq.s32.totalorder %s13, 1
    %p52 = scmp.ne.s32.totalorder %s47, %s49
    %p53 = scmp.eq.s32.totalorder %s13, 0
    %p54 = por %p52, %p53
    %p55 = scmp.ne.s32.totalorder %s47, %s49
    %p56 = scmp.eq.s32.totalorder %s18, 1
    %p57 = por %p55, %p56
    %p58 = scmp.ne.s32.totalorder %s49, %s50
    %p59 = scmp.eq.s32.totalorder %s18, 0
    %p60 = por %p58, %p59
    %p61 = scmp.ne.s32.totalorder %s49, %s50
    %p62 = scmp.eq.s32.totalorder %s19, 1
    %p63 = por %p61, %p62
    %p65 = scmp.ne.s32.totalorder %s50, %s64
    %p66 = scmp.eq.s32.totalorder %s19, 0
    %p67 = por %p65, %p66
    %s69 = sadd.s32 %s68, 1
    %p72 = scmp.eq.s32.totalorder %s13, 1
    %p73 = scmp.ne.s32.totalorder %s68, %s70
    %p74 = scmp.eq.s32.totalorder %s13, 0
    %p75 = por %p73, %p74
    %p76 = scmp.ne.s32.totalorder %s68, %s70
    %p77 = scmp.eq.s32.totalorder %s18, 1
    %p78 = por %p76, %p77
    %p79 = scmp.ne.s32.totalorder %s70, %s71
    %p80 = scmp.eq.s32.totalorder %s18, 0
    %p81 = por %p79, %p80
    %p82 = scmp.ne.s32.totalorder %s70, %s71
    %p83 = scmp.eq.s32.totalorder %s19, 1
    %p84 = por %p82, %p83
    %p86 = scmp.ne.s32.totalorder %s71, %s85
    %p87 = scmp.eq.s32.totalorder %s19, 0
    %p88 = por %p86, %p87
    %s90 = sadd.s32 %s89, 1
    %p93 = scmp.eq.s32.totalorder %s13, 1
    %p94 = scmp.ne.s32.totalorder %s89, %s91
    %p95 = scmp.eq.s32.totalorder %s13, 0
    %p96 = por %p94, %p95
    %p97 = scmp.ne.s32.totalorder %s89, %s91
    %p98 = scmp.eq.s32.totalorder %s18, 1
    %p99 = por %p97, %p98
    %p100 = scmp.ne.s32.totalorder %s91, %s92
    %p101 = scmp.eq.s32.totalorder %s18, 0
    %p102 = por %p100, %p101
    %p103 = scmp.ne.s32.totalorder %s91, %s92
    %p104 = scmp.eq.s32.totalorder %s19, 1
    %p105 = por %p103, %p104
    %p107 = scmp.ne.s32.totalorder %s92, %s106
    %p108 = scmp.eq.s32.totalorder %s19, 0
    %p109 = por %p107, %p108
    %s111 = sadd.s32 %s110, 1
    %p114 = scmp.eq.s32.totalorder %s13, 1
    %p115 = scmp.ne.s32.totalorder %s110, %s112
    %p116 = scmp.eq.s32.totalorder %s13, 0
    %p117 = por %p115, %p116
    %p118 = scmp.ne.s32.totalorder %s110, %s112
    %p119 = scmp.eq.s32.totalorder %s18, 1
    %p120 = por %p118, %p119
    %p121 = scmp.ne.s32.totalorder %s112, %s113
    %p122 = scmp.eq.s32.totalorder %s18, 0
    %p123 = por %p121, %p122
    %p124 = scmp.ne.s32.totalorder %s112, %s113
    %p125 = scmp.eq.s32.totalorder %s19, 1
    %p126 = por %p124, %p125
    %p128 = scmp.ne.s32.totalorder %s113, %s127
    %p129 = scmp.eq.s32.totalorder %s19, 0
    %p130 = por %p128, %p129
    %s132 = sadd.s32 %s131, 1
    %p135 = scmp.eq.s32.totalorder %s13, 1
    %p136 = scmp.ne.s32.totalorder %s131, %s133
    %p137 = scmp.eq.s32.totalorder %s13, 0
    %p138 = por %p136, %p137
    %p139 = scmp.ne.s32.totalorder %s131, %s133
    %p140 = scmp.eq.s32.totalorder %s18, 1
    %p141 = por %p139, %p140
    %p142 = scmp.ne.s32.totalorder %s133, %s134
    %p143 = scmp.eq.s32.totalorder %s18, 0
    %p144 = por %p142, %p143
    %p145 = scmp.ne.s32.totalorder %s133, %s134
    %p146 = scmp.eq.s32.totalorder %s19, 1
    %p147 = por %p145, %p146
    %p149 = scmp.ne.s32.totalorder %s134, %s148
    %p150 = scmp.eq.s32.totalorder %s19, 0
    %p151 = por %p149, %p150
    %s152 = ssub.s32 %s13, %s20
    %p153 = scmp.eq.s32.totalorder %s152, 0
    %s155 = sadd.s32 %s154, 1
    %s156 = scalar_select %p153, %s154, %s155
    %p159 = pneg %p153
    %p160 = scmp.eq.s32.totalorder %s13, 1
    %p161 = por %p159, %p160
    %p162 = scmp.ne.s32.totalorder %s154, %s157
    %p163 = scmp.eq.s32.totalorder %s13, 0
    %p164 = por %p162, %p163
    %p165 = scmp.ne.s32.totalorder %s154, %s157
    %p166 = scmp.eq.s32.totalorder %s18, 1
    %p167 = por %p165, %p166
    %p168 = scmp.ne.s32.totalorder %s157, %s158
    %p169 = scmp.eq.s32.totalorder %s18, 0
    %p170 = por %p168, %p169
    %p171 = scmp.ne.s32.totalorder %s157, %s158
    %p172 = scmp.eq.s32.totalorder %s19, 1
    %p173 = por %p171, %p172
    %p175 = scmp.ne.s32.totalorder %s158, %s174
    %p176 = scmp.eq.s32.totalorder %s19, 0
    %p177 = por %p175, %p176
    %s178 = ssub.s32 %s13, %s20
    %p179 = scmp.eq.s32.totalorder %s178, 0
    %s181 = sadd.s32 %s180, 1
    %s182 = scalar_select %p179, %s180, %s181
    %p185 = pneg %p179
    %p186 = scmp.eq.s32.totalorder %s13, 1
    %p187 = por %p185, %p186
    %p188 = scmp.ne.s32.totalorder %s180, %s183
    %p189 = scmp.eq.s32.totalorder %s13, 0
    %p190 = por %p188, %p189
    %p191 = scmp.ne.s32.totalorder %s180, %s183
    %p192 = scmp.eq.s32.totalorder %s18, 1
    %p193 = por %p191, %p192
    %p194 = scmp.ne.s32.totalorder %s183, %s184
    %p195 = scmp.eq.s32.totalorder %s18, 0
    %p196 = por %p194, %p195
    %p197 = scmp.ne.s32.totalorder %s183, %s184
    %p198 = scmp.eq.s32.totalorder %s19, 1
    %p199 = por %p197, %p198
    %p201 = scmp.ne.s32.totalorder %s184, %s200
    %p202 = scmp.eq.s32.totalorder %s19, 0
    %p203 = por %p201, %p202
    %p204 = scmp.le.s32.totalorder 1, %s13
    %p205 = scmp.lt.s32.totalorder %s13, 3
    %p206 = pnand %p204, %p205
    %p207 = pneg %p206
    // Predicated region
    $region9: #{neck_forward.1} parent=5 // pred_check
      _
    $region10: #{neck_forward.1} parent=5 // pred_check_branch
      %209 = sbr.rel (%p206) target = $region12
    $region11: #{neck_forward.1} parent=5 // pred_region
      %s210 = ssub.s32 %s13, 1
      // Predicated region
      $region13: #{neck_forward.1} parent=11 // pred_check
        %p211 = pneg %p60
      $region14: #{neck_forward.1} parent=11 // pred_check_branch
        %213 = sbr.rel (%p211) target = $region16
      $region15: #{neck_forward.1} parent=11 // pred_region
        _
      $region16: #{neck_forward.1} parent=11 // pred_fallthru
        _
      // Predicated region
      $region17: #{neck_forward.1} parent=11 // pred_check
        %p214 = pneg %p81
      $region18: #{neck_forward.1} parent=11 // pred_check_branch
        %216 = sbr.rel (%p214) target = $region20
      $region19: #{neck_forward.1} parent=11 // pred_region
        _
      $region20: #{neck_forward.1} parent=11 // pred_fallthru
        _
      // Predicated region
      $region21: #{neck_forward.1} parent=11 // pred_check
        %p217 = pneg %p102
      $region22: #{neck_forward.1} parent=11 // pred_check_branch
        %219 = sbr.rel (%p217) target = $region24
      $region23: #{neck_forward.1} parent=11 // pred_region
        _
      $region24: #{neck_forward.1} parent=11 // pred_fallthru
        _
      // Predicated region
      $region25: #{neck_forward.1} parent=11 // pred_check
        %p220 = pneg %p123
      $region26: #{neck_forward.1} parent=11 // pred_check_branch
        %222 = sbr.rel (%p220) target = $region28
      $region27: #{neck_forward.1} parent=11 // pred_region
        _
      $region28: #{neck_forward.1} parent=11 // pred_fallthru
        _
      // Predicated region
      $region29: #{neck_forward.1} parent=11 // pred_check
        %p223 = pneg %p144
      $region30: #{neck_forward.1} parent=11 // pred_check_branch
        %225 = sbr.rel (%p223) target = $region32
      $region31: #{neck_forward.1} parent=11 // pred_region
        _
      $region32: #{neck_forward.1} parent=11 // pred_fallthru
        _
    $region12: #{neck_forward.1} parent=5 // pred_fallthru
      _
    %p226 = scmp.lt.s32.totalorder %s13, 2
    // Predicated region
    $region33: #{neck_forward.1} parent=5 // pred_check
      %p227 = pneg %p226
    $region34: #{neck_forward.1} parent=5 // pred_check_branch
      %229 = sbr.rel (%p227) target = $region36
    $region35: #{neck_forward.1} parent=5 // pred_region
      // Predicated region
      $region37: #{neck_forward.1} parent=35 // pred_check
        %p230 = pneg %p33
      $region38: #{neck_forward.1} parent=35 // pred_check_branch
        %232 = sbr.rel (%p230) target = $region40
      $region39: #{neck_forward.1} parent=35 // pred_region
        %s233 = smul.u32 4, %s13
        %p234 = scmp.lt.s32.totalorder %s233, 7
        %s235 = scalar_select %p234, %s233, 7
        %s236 = smul.addr %s235, 8
        %s237 = scalar_lea.vmem %s0, %s236
        %s238 = smul.u32 4, %s13
      $region40: #{neck_forward.1} parent=35 // pred_fallthru
        _
      // Predicated region
      $region41: #{neck_forward.1} parent=35 // pred_check
        %p239 = pneg %p164
      $region42: #{neck_forward.1} parent=35 // pred_check_branch
        %241 = sbr.rel (%p239) target = $region44
      $region43: #{neck_forward.1} parent=35 // pred_region
        %s242 = smul.u32 4, %s13
        %p243 = scmp.lt.s32.totalorder %s242, 7
        %s244 = scalar_select %p243, %s242, 7
        %s245 = scalar_lea.vmem %s6, %s244
        %s246 = smul.u32 4, %s13
      $region44: #{neck_forward.1} parent=35 // pred_fallthru
        _
    $region36: #{neck_forward.1} parent=5 // pred_fallthru
      _
    %p247 = scmp.le.s32.totalorder 1, %s13
    %p248 = scmp.lt.s32.totalorder %s13, 3
    %p249 = pnand %p247, %p248
    %p250 = pneg %p249
    // Predicated region
    $region45: #{neck_forward.1} parent=5 // pred_check
      _
    $region46: #{neck_forward.1} parent=5 // pred_check_branch
      %252 = sbr.rel (%p249) target = $region48
    $region47: #{neck_forward.1} parent=5 // pred_region
      %s253 = ssub.s32 %s13, 1
      %s254 = smul.u32 4, %s18
      %p255 = scmp.lt.s32.totalorder %s254, 7
      %s256 = scalar_select %p255, %s254, 7
      %s257 = smul.addr %s256, 8
      %s258 = scalar_lea.vmem %s0, %s257
      %p259 = pneg %p39
      %p260 = pneg %p36
      %p261 = pneg %p60
      %p262 = pneg %p57
      %p263 = pneg %p81
      %p264 = pneg %p78
      %p265 = pneg %p102
      %p266 = pneg %p99
      %p267 = pneg %p123
      %p268 = pneg %p120
      %p269 = pneg %p144
      %p270 = pneg %p141
      %s271 = smul.u32 4, %s18
      %p272 = scmp.lt.s32.totalorder %s271, 7
      %s273 = scalar_select %p272, %s271, 7
      %s274 = scalar_lea.vmem %s6, %s273
      %p275 = pneg %p170
      %p276 = pneg %p167
      %p277 = pneg %p196
      %p278 = pneg %p193
      %s279 = smul.u32 4, %s18
      %p280 = scmp.lt.s32.totalorder %s279, 7
      %s281 = scalar_select %p280, %s279, 7
      %s282 = smul.addr %s281, 8
      %s283 = scalar_lea.vmem %s7, %s282
      %s284 = smul.u32 4, %s18
      %p285 = scmp.lt.s32.totalorder %s284, 7
      %s286 = scalar_select %p285, %s284, 7
      %s287 = smul.addr %s286, 8
      %s288 = scalar_lea.vmem %s0, %s287
      %s289 = smul.u32 4, %s18
      %s290 = smul.u32 4, %s18
      %p291 = scmp.lt.s32.totalorder %s290, 7
      %s292 = scalar_select %p291, %s290, 7
      %s293 = scalar_lea.vmem %s6, %s292
      %s294 = smul.u32 4, %s18
      %s295 = smul.u32 4, %s18
      %p296 = scmp.lt.s32.totalorder %s295, 7
      %s297 = scalar_select %p296, %s295, 7
      %s298 = smul.addr %s297, 8
      %s299 = scalar_lea.vmem %s7, %s298
      %s300 = smul.u32 4, %s18
      %v302 = vld [vmem:[%s5] sm:$0xff]
      %v303 = vld [vmem:[%s5 + $0x8] sm:$0xff]
      %v304 = vld [vmem:[%s5 + $0x10] sm:$0xff]
      %v305 = vld [vmem:[%s5 + $0x18] sm:$0xff]
      %v306 = vld [vmem:[%s5 + $0x20] sm:$0x1]
      %v307 = vld [vmem:[%s5 + $0x28] sm:$0x1]
      %v308 = vld [vmem:[%s5 + $0x30] sm:$0x1]
      %v309 = vld [vmem:[%s5 + $0x38] sm:$0x1]
      %v310 = vld [vmem:[%s293] sm:$0xf]
      %v311 = vld [vmem:[%s288] sm:$0xff]
      %v312 = vld [vmem:[%s288 + $0x8] sm:$0xff]
      %v313 = vld [vmem:[%s288 + $0x10] sm:$0xff]
      %v314 = vld [vmem:[%s288 + $0x18] sm:$0xff]
      %315 = vrot.lane.b32.xlu0 %v311, 17
      %v316 = vpop.permute.xlu0 %315
      %317 = vrot.lane.b32.xlu0 %v312, 17
      %v318 = vpop.permute.xlu0 %317
      %319 = vrot.lane.b32.xlu0 %v313, 17
      %v320 = vpop.permute.xlu0 %319
      %321 = vrot.lane.b32.xlu0 %v314, 17
      %v322 = vpop.permute.xlu0 %321
      %v323 = vlaneseq
      %v324 = vand.u32 %v323, 127
      %vm325 = vcmp.lt.s32.totalorder %v324, 17
      %v326 = vsel %vm325, %v320, %v322
      %v327 = vsel %vm325, %v318, %v320
      %v328 = vsel %vm325, %v316, %v318
      %v329 = vsel %vm325, %v322, %v316
      %v330 = vlaneseq
      %v331 = vshrl.u32 %v330, 7
      %v332 = vsub.s32 0, %v331
      %v333 = vrot.slane %v302, %v332
      %v334 = vlaneseq
      %v335 = vshrl.u32 %v334, 7
      %v336 = vsub.s32 0, %v335
      %v337 = vrot.slane %v303, %v336
      %v338 = vlaneseq
      %v339 = vshrl.u32 %v338, 7
      %v340 = vsub.s32 0, %v339
      %v341 = vrot.slane %v304, %v340
      %v342 = vlaneseq
      %v343 = vshrl.u32 %v342, 7
      %v344 = vsub.s32 0, %v343
      %v345 = vrot.slane %v305, %v344
      %v346 = vmul.f32 %v329, %v333
      %v347 = vmul.f32 %v328, %v337
      %v348 = vmul.f32 %v327, %v341
      %v349 = vmul.f32 %v326, %v345
      %350 = vrot.lane.b32.xlu0 %v311, 16
      %v351 = vpop.permute.xlu0 %350
      %352 = vrot.lane.b32.xlu0 %v312, 16
      %v353 = vpop.permute.xlu0 %352
      %354 = vrot.lane.b32.xlu0 %v313, 16
      %v355 = vpop.permute.xlu0 %354
      %356 = vrot.lane.b32.xlu0 %v314, 16
      %v357 = vpop.permute.xlu0 %356
      %vm358 = vcmp.lt.s32.totalorder %v324, 16
      %v359 = vsel %vm358, %v355, %v357
      %v360 = vsel %vm358, %v353, %v355
      %v361 = vsel %vm358, %v351, %v353
      %v362 = vsel %vm358, %v357, %v351
      %v363 = vlaneseq
      %v364 = vshrl.u32 %v363, 7
      %v365 = vsub.s32 1, %v364
      %v366 = vrot.slane %v302, %v365
      %v367 = vlaneseq
      %v368 = vshrl.u32 %v367, 7
      %v369 = vsub.s32 1, %v368
      %v370 = vrot.slane %v303, %v369
      %v371 = vlaneseq
      %v372 = vshrl.u32 %v371, 7
      %v373 = vsub.s32 1, %v372
      %v374 = vrot.slane %v304, %v373
      %v375 = vlaneseq
      %v376 = vshrl.u32 %v375, 7
      %v377 = vsub.s32 1, %v376
      %v378 = vrot.slane %v305, %v377
      %v379 = vmul.f32 %v362, %v366
      %v380 = vmul.f32 %v361, %v370
      %v381 = vmul.f32 %v360, %v374
      %v382 = vmul.f32 %v359, %v378
      %383 = vrot.lane.b32.xlu0 %v311, 15
      %v384 = vpop.permute.xlu0 %383
      %385 = vrot.lane.b32.xlu0 %v312, 15
      %v386 = vpop.permute.xlu0 %385
      %387 = vrot.lane.b32.xlu0 %v313, 15
      %v388 = vpop.permute.xlu0 %387
      %389 = vrot.lane.b32.xlu0 %v314, 15
      %v390 = vpop.permute.xlu0 %389
      %vm391 = vcmp.lt.s32.totalorder %v324, 15
      %v392 = vsel %vm391, %v388, %v390
      %v393 = vsel %vm391, %v386, %v388
      %v394 = vsel %vm391, %v384, %v386
      %v395 = vsel %vm391, %v390, %v384
      %v396 = vlaneseq
      %v397 = vshrl.u32 %v396, 7
      %v398 = vsub.s32 2, %v397
      %v399 = vrot.slane %v302, %v398
      %v400 = vlaneseq
      %v401 = vshrl.u32 %v400, 7
      %v402 = vsub.s32 2, %v401
      %v403 = vrot.slane %v303, %v402
      %v404 = vlaneseq
      %v405 = vshrl.u32 %v404, 7
      %v406 = vsub.s32 2, %v405
      %v407 = vrot.slane %v304, %v406
      %v408 = vlaneseq
      %v409 = vshrl.u32 %v408, 7
      %v410 = vsub.s32 2, %v409
      %v411 = vrot.slane %v305, %v410
      %v412 = vmul.f32 %v395, %v399
      %v413 = vmul.f32 %v394, %v403
      %v414 = vmul.f32 %v393, %v407
      %v415 = vmul.f32 %v392, %v411
      %416 = vrot.lane.b32.xlu0 %v311, 1
      %v417 = vpop.permute.xlu0 %416
      %418 = vrot.lane.b32.xlu0 %v312, 1
      %v419 = vpop.permute.xlu0 %418
      %420 = vrot.lane.b32.xlu0 %v313, 1
      %v421 = vpop.permute.xlu0 %420
      %422 = vrot.lane.b32.xlu0 %v314, 1
      %v423 = vpop.permute.xlu0 %422
      %vm424 = vcmp.lt.s32.totalorder %v324, 1
      %v425 = vsel %vm424, %v421, %v423
      %v426 = vsel %vm424, %v419, %v421
      %v427 = vsel %vm424, %v417, %v419
      %v428 = vsel %vm424, %v423, %v417
      %v429 = vlaneseq
      %v430 = vshrl.u32 %v429, 7
      %v431 = vsub.s32 3, %v430
      %v432 = vrot.slane %v302, %v431
      %v433 = vlaneseq
      %v434 = vshrl.u32 %v433, 7
      %v435 = vsub.s32 3, %v434
      %v436 = vrot.slane %v303, %v435
      %v437 = vlaneseq
      %v438 = vshrl.u32 %v437, 7
      %v439 = vsub.s32 3, %v438
      %v440 = vrot.slane %v304, %v439
      %v441 = vlaneseq
      %v442 = vshrl.u32 %v441, 7
      %v443 = vsub.s32 3, %v442
      %v444 = vrot.slane %v305, %v443
      %v445 = vmul.f32 %v428, %v432
      %v446 = vmul.f32 %v427, %v436
      %v447 = vmul.f32 %v426, %v440
      %v448 = vmul.f32 %v425, %v444
      %v449 = vlaneseq
      %v450 = vshrl.u32 %v449, 7
      %v451 = vsub.s32 4, %v450
      %v452 = vrot.slane %v302, %v451
      %v453 = vlaneseq
      %v454 = vshrl.u32 %v453, 7
      %v455 = vsub.s32 4, %v454
      %v456 = vrot.slane %v303, %v455
      %v457 = vlaneseq
      %v458 = vshrl.u32 %v457, 7
      %v459 = vsub.s32 4, %v458
      %v460 = vrot.slane %v304, %v459
      %v461 = vlaneseq
      %v462 = vshrl.u32 %v461, 7
      %v463 = vsub.s32 4, %v462
      %v464 = vrot.slane %v305, %v463
      %v465 = vmul.f32 %v311, %v452
      %v466 = vmul.f32 %v312, %v456
      %v467 = vmul.f32 %v313, %v460
      %v468 = vmul.f32 %v314, %v464
      %469 = vrot.lane.b32.xlu0 %v311, 127
      %v470 = vpop.permute.xlu0 %469
      %471 = vrot.lane.b32.xlu0 %v312, 127
      %v472 = vpop.permute.xlu0 %471
      %473 = vrot.lane.b32.xlu0 %v313, 127
      %v474 = vpop.permute.xlu0 %473
      %475 = vrot.lane.b32.xlu0 %v314, 127
      %v476 = vpop.permute.xlu0 %475
      %vm477 = vcmp.lt.s32.totalorder %v324, 127
      %v478 = vsel %vm477, %v474, %v476
      %v479 = vsel %vm477, %v472, %v474
      %v480 = vsel %vm477, %v470, %v472
      %v481 = vsel %vm477, %v476, %v470
      %v482 = vlaneseq
      %v483 = vshrl.u32 %v482, 7
      %v484 = vsub.s32 5, %v483
      %v485 = vrot.slane %v302, %v484
      %v486 = vlaneseq
      %v487 = vshrl.u32 %v486, 7
      %v488 = vsub.s32 5, %v487
      %v489 = vrot.slane %v303, %v488
      %v490 = vlaneseq
      %v491 = vshrl.u32 %v490, 7
      %v492 = vsub.s32 5, %v491
      %v493 = vrot.slane %v304, %v492
      %v494 = vlaneseq
      %v495 = vshrl.u32 %v494, 7
      %v496 = vsub.s32 5, %v495
      %v497 = vrot.slane %v305, %v496
      %v498 = vmul.f32 %v480, %v485
      %v499 = vmul.f32 %v479, %v489
      %v500 = vmul.f32 %v478, %v493
      %v501 = vmul.f32 %v481, %v497
      %502 = vrot.lane.b32.xlu0 %v311, 113
      %v503 = vpop.permute.xlu0 %502
      %504 = vrot.lane.b32.xlu0 %v312, 113
      %v505 = vpop.permute.xlu0 %504
      %506 = vrot.lane.b32.xlu0 %v313, 113
      %v507 = vpop.permute.xlu0 %506
      %508 = vrot.lane.b32.xlu0 %v314, 113
      %v509 = vpop.permute.xlu0 %508
      %vm510 = vcmp.lt.s32.totalorder %v324, 113
      %v511 = vsel %vm510, %v507, %v509
      %v512 = vsel %vm510, %v505, %v507
      %v513 = vsel %vm510, %v503, %v505
      %v514 = vsel %vm510, %v509, %v503
      %v515 = vlaneseq
      %v516 = vshrl.u32 %v515, 7
      %v517 = vsub.s32 6, %v516
      %v518 = vrot.slane %v302, %v517
      %v519 = vlaneseq
      %v520 = vshrl.u32 %v519, 7
      %v521 = vsub.s32 6, %v520
      %v522 = vrot.slane %v303, %v521
      %v523 = vlaneseq
      %v524 = vshrl.u32 %v523, 7
      %v525 = vsub.s32 6, %v524
      %v526 = vrot.slane %v304, %v525
      %v527 = vlaneseq
      %v528 = vshrl.u32 %v527, 7
      %v529 = vsub.s32 6, %v528
      %v530 = vrot.slane %v305, %v529
      %v531 = vmul.f32 %v513, %v518
      %v532 = vmul.f32 %v512, %v522
      %v533 = vmul.f32 %v511, %v526
      %v534 = vmul.f32 %v514, %v530
      %535 = vrot.lane.b32.xlu0 %v311, 112
      %v536 = vpop.permute.xlu0 %535
      %537 = vrot.lane.b32.xlu0 %v312, 112
      %v538 = vpop.permute.xlu0 %537
      %539 = vrot.lane.b32.xlu0 %v313, 112
      %v540 = vpop.permute.xlu0 %539
      %541 = vrot.lane.b32.xlu0 %v314, 112
      %v542 = vpop.permute.xlu0 %541
      %vm543 = vcmp.lt.s32.totalorder %v324, 112
      %v544 = vsel %vm543, %v540, %v542
      %v545 = vsel %vm543, %v538, %v540
      %v546 = vsel %vm543, %v536, %v538
      %v547 = vsel %vm543, %v542, %v536
      %v548 = vlaneseq
      %v549 = vshrl.u32 %v548, 7
      %v550 = vsub.s32 7, %v549
      %v551 = vrot.slane %v302, %v550
      %v552 = vlaneseq
      %v553 = vshrl.u32 %v552, 7
      %v554 = vsub.s32 7, %v553
      %v555 = vrot.slane %v303, %v554
      %v556 = vlaneseq
      %v557 = vshrl.u32 %v556, 7
      %v558 = vsub.s32 7, %v557
      %v559 = vrot.slane %v304, %v558
      %v560 = vlaneseq
      %v561 = vshrl.u32 %v560, 7
      %v562 = vsub.s32 7, %v561
      %v563 = vrot.slane %v305, %v562
      %v564 = vmul.f32 %v546, %v551
      %v565 = vmul.f32 %v545, %v555
      %v566 = vmul.f32 %v544, %v559
      %v567 = vmul.f32 %v547, %v563
      %568 = vrot.lane.b32.xlu0 %v311, 111
      %v569 = vpop.permute.xlu0 %568
      %570 = vrot.lane.b32.xlu0 %v312, 111
      %v571 = vpop.permute.xlu0 %570
      %572 = vrot.lane.b32.xlu0 %v313, 111
      %v573 = vpop.permute.xlu0 %572
      %574 = vrot.lane.b32.xlu0 %v314, 111
      %v575 = vpop.permute.xlu0 %574
      %vm576 = vcmp.lt.s32.totalorder %v324, 111
      %v577 = vsel %vm576, %v573, %v575
      %v578 = vsel %vm576, %v571, %v573
      %v579 = vsel %vm576, %v569, %v571
      %v580 = vsel %vm576, %v575, %v569
      %v581 = vlaneseq
      %v582 = vshrl.u32 %v581, 7
      %v583 = vsub.s32 0, %v582
      %v584 = vrot.slane %v306, %v583
      %v585 = vlaneseq
      %v586 = vshrl.u32 %v585, 7
      %v587 = vsub.s32 0, %v586
      %v588 = vrot.slane %v307, %v587
      %v589 = vlaneseq
      %v590 = vshrl.u32 %v589, 7
      %v591 = vsub.s32 0, %v590
      %v592 = vrot.slane %v308, %v591
      %v593 = vlaneseq
      %v594 = vshrl.u32 %v593, 7
      %v595 = vsub.s32 0, %v594
      %v596 = vrot.slane %v309, %v595
      %v597 = vmul.f32 %v579, %v584
      %v598 = vmul.f32 %v578, %v588
      %v599 = vmul.f32 %v577, %v592
      %v600 = vmul.f32 %v580, %v596
      %v601 = vpack.c.bf16 %v379, %v346
      %v602 = vpack.c.bf16 %v380, %v347
      %v603 = vpack.c.bf16 %v381, %v348
      %v604 = vpack.c.bf16 %v382, %v349
      %v605 = vpack.c.bf16 %v445, %v412
      %v606 = vpack.c.bf16 %v446, %v413
      %v607 = vpack.c.bf16 %v447, %v414
      %v608 = vpack.c.bf16 %v448, %v415
      %v609 = vpack.c.bf16 %v498, %v465
      %v610 = vpack.c.bf16 %v499, %v466
      %v611 = vpack.c.bf16 %v500, %v467
      %v612 = vpack.c.bf16 %v501, %v468
      %v613 = vpack.c.bf16 %v564, %v531
      %v614 = vpack.c.bf16 %v565, %v532
      %v615 = vpack.c.bf16 %v566, %v533
      %v616 = vpack.c.bf16 %v567, %v534
      %v617 = vpack.c.bf16 %v597, %v597
      %v618 = vpack.c.bf16 %v598, %v598
      %v619 = vpack.c.bf16 %v599, %v599
      %v620 = vpack.c.bf16 %v600, %v600
      %v621 = vld [vmem:[%s1] sm:$0xf]
      %v622 = vld [vmem:[%s2] sm:$0xff]
      %624 = vset.pattern.permute.xlu0 0
      %625 = vperm.xlu0 %624, %v622
      %v626 = vpop.permute.xlu0 %625
      %vm628 = vcmask 588800
      %v630 = vsel %vm628, %v621, 0
      %vm632 = vcmask 1043456
      %v634 = vsel %vm632, %v617, 0
      %v637 = vsel %vm632, %v618, 0
      %v640 = vsel %vm632, %v619, 0
      %v643 = vsel %vm632, %v620, 0
      %645 = vmatprep.subr.bf16.mxu0 %v602
      %646 = vmatpush1.bf16.msra.mxu0 %v601
      %647 = vmatprep.subr.bf16.mxu0 %v606
      %648 = vmatpush1.bf16.msra.mxu0 %v605
      %649 = vmatprep.subr.bf16.mxu0 %v610
      %650 = vmatpush1.bf16.msra.mxu0 %v609
      %651 = vmatprep.subr.bf16.mxu0 %v614
      %652 = vmatpush1.bf16.msra.mxu0 %v613
      %653 = vmatprep.subr.bf16.mxu0 %v637
      %654 = vmatpush1.bf16.msra.mxu0 %v634
      %655 = vmatprep.subr.bf16.mxu0 0
      %656 = vmatpush1.bf16.msra.mxu0 0
      %657 = vmatprep.subr.bf16.mxu0 0
      %658 = vmatpush1.bf16.msra.mxu0 0
      %659 = vmatprep.subr.bf16.mxu0 0
      %660 = vmatpush1.bf16.msra.mxu0 0
      %661 = vmatprep.subr.bf16.mxu0 0
      %662 = vmatpush1.bf16.msra.mxu0 0
      %663 = vmatprep.subr.bf16.mxu0 0
      %664 = vmatpush1.bf16.msra.mxu0 0
      %665 = vmatprep.subr.bf16.mxu0 0
      %666 = vmatpush1.bf16.msra.mxu0 0
      %667 = vmatprep.subr.bf16.mxu0 0
      %668 = vmatpush1.bf16.msra.mxu0 0
      %669 = vmatprep.subr.bf16.mxu0 0
      %670 = vmatpush1.bf16.msra.mxu0 0
      %671 = vmatprep.subr.bf16.mxu0 0
      %672 = vmatpush1.bf16.msra.mxu0 0
      %673 = vmatprep.subr.bf16.mxu0 0
      %674 = vmatpush1.bf16.msra.mxu0 0
      %675 = vmatprep.subr.bf16.mxu0 0
      %676 = vmatpush1.bf16.msra.mxu0 0
      %677 = vmatprep.mubr.bf16.mxu0 0
      %678 = vmatmul.mubr.bf16.gmra.mrb[0].mxu0 %v630
      %v679 = vpop.f32.mrb[0].mxu0
      %v680 = vadd.f32 %v626, %v679
      %v681 = vpop.f32.mrb[0].mxu0
      %v682 = vadd.f32 %v626, %v681
      %v683 = vpop.f32.mrb[0].mxu0
      %v684 = vpop.f32.mrb[0].mxu0
      %685 = vdwg.mxu0
      %686 = vmatprep.subr.bf16.mxu0 %v604
      %687 = vmatpush1.bf16.msra.mxu0 %v603
      %688 = vmatprep.subr.bf16.mxu0 %v608
      %689 = vmatpush1.bf16.msra.mxu0 %v607
      %690 = vmatprep.subr.bf16.mxu0 %v612
      %691 = vmatpush1.bf16.msra.mxu0 %v611
      %692 = vmatprep.subr.bf16.mxu0 %v616
      %693 = vmatpush1.bf16.msra.mxu0 %v615
      %694 = vmatprep.subr.bf16.mxu0 %v643
      %695 = vmatpush1.bf16.msra.mxu0 %v640
      %696 = vmatprep.subr.bf16.mxu0 0
      %697 = vmatpush1.bf16.msra.mxu0 0
      %698 = vmatprep.subr.bf16.mxu0 0
      %699 = vmatpush1.bf16.msra.mxu0 0
      %700 = vmatprep.subr.bf16.mxu0 0
      %701 = vmatpush1.bf16.msra.mxu0 0
      %702 = vmatprep.subr.bf16.mxu0 0
      %703 = vmatpush1.bf16.msra.mxu0 0
      %704 = vmatprep.subr.bf16.mxu0 0
      %705 = vmatpush1.bf16.msra.mxu0 0
      %706 = vmatprep.subr.bf16.mxu0 0
      %707 = vmatpush1.bf16.msra.mxu0 0
      %708 = vmatprep.subr.bf16.mxu0 0
      %709 = vmatpush1.bf16.msra.mxu0 0
      %710 = vmatprep.subr.bf16.mxu0 0
      %711 = vmatpush1.bf16.msra.mxu0 0
      %712 = vmatprep.subr.bf16.mxu0 0
      %713 = vmatpush1.bf16.msra.mxu0 0
      %714 = vmatprep.subr.bf16.mxu0 0
      %715 = vmatpush1.bf16.msra.mxu0 0
      %716 = vmatprep.subr.bf16.mxu0 0
      %717 = vmatpush1.bf16.msra.mxu0 0
      %718 = vmatprep.mubr.bf16.mxu0 0
      %719 = vmatmul.mubr.bf16.gmra.mrb[0].mxu0 %v630
      %v720 = vpop.f32.mrb[0].mxu0
      %v721 = vadd.f32 %v626, %v720
      %v722 = vpop.f32.mrb[0].mxu0
      %v723 = vadd.f32 %v626, %v722
      %v724 = vpop.f32.mrb[0].mxu0
      %v725 = vpop.f32.mrb[0].mxu0
      %726 = vdwg.mxu0
      %v727 = vmax.f32 %v680, 0.0
      %v728 = vmax.f32 %v682, 0.0
      %v729 = vmax.f32 %v721, 0.0
      %v730 = vmax.f32 %v723, 0.0
      %v732 = vlaneseq
      %v733 = vshrl.u32 %v732, 7
      %v734 = vsub.s32 0, %v733
      %v735 = vrot.slane %v310, %v734
      %v736 = vlaneseq
      %v737 = vshrl.u32 %v736, 7
      %v738 = vsub.s32 1, %v737
      %v739 = vrot.slane %v310, %v738
      %v740 = vlaneseq
      %v741 = vshrl.u32 %v740, 7
      %v742 = vsub.s32 2, %v741
      %v743 = vrot.slane %v310, %v742
      %v744 = vlaneseq
      %v745 = vshrl.u32 %v744, 7
      %v746 = vsub.s32 3, %v745
      %v747 = vrot.slane %v310, %v746
      %v752 = vmul.f32 %v727, %v735
      %v753 = vmul.f32 %v728, %v739
      %v754 = vmul.f32 %v729, %v743
      %v755 = vmul.f32 %v730, %v747
      %756 = vrot.lane.b32.xlu0 %v752, 17
      %v757 = vpop.permute.xlu0 %756
      %758 = vrot.lane.b32.xlu0 %v753, 17
      %v759 = vpop.permute.xlu0 %758
      %760 = vrot.lane.b32.xlu0 %v754, 17
      %v761 = vpop.permute.xlu0 %760
      %762 = vrot.lane.b32.xlu0 %v755, 17
      %v763 = vpop.permute.xlu0 %762
      %v764 = vsel %vm325, %v761, %v763
      %v765 = vsel %vm325, %v759, %v761
      %v766 = vsel %vm325, %v757, %v759
      %v767 = vsel %vm325, %v763, %v757
      %v768 = vmul.f32 %v767, %v333
      %v769 = vmul.f32 %v766, %v337
      %v770 = vmul.f32 %v765, %v341
      %v771 = vmul.f32 %v764, %v345
      %772 = vrot.lane.b32.xlu0 %v752, 16
      %v773 = vpop.permute.xlu0 %772
      %774 = vrot.lane.b32.xlu0 %v753, 16
      %v775 = vpop.permute.xlu0 %774
      %776 = vrot.lane.b32.xlu0 %v754, 16
      %v777 = vpop.permute.xlu0 %776
      %778 = vrot.lane.b32.xlu0 %v755, 16
      %v779 = vpop.permute.xlu0 %778
      %v780 = vsel %vm358, %v777, %v779
      %v781 = vsel %vm358, %v775, %v777
      %v782 = vsel %vm358, %v773, %v775
      %v783 = vsel %vm358, %v779, %v773
      %v784 = vmul.f32 %v783, %v366
      %v785 = vmul.f32 %v782, %v370
      %v786 = vmul.f32 %v781, %v374
      %v787 = vmul.f32 %v780, %v378
      %788 = vrot.lane.b32.xlu0 %v752, 15
      %v789 = vpop.permute.xlu0 %788
      %790 = vrot.lane.b32.xlu0 %v753, 15
      %v791 = vpop.permute.xlu0 %790
      %792 = vrot.lane.b32.xlu0 %v754, 15
      %v793 = vpop.permute.xlu0 %792
      %794 = vrot.lane.b32.xlu0 %v755, 15
      %v795 = vpop.permute.xlu0 %794
      %v796 = vsel %vm391, %v793, %v795
      %v797 = vsel %vm391, %v791, %v793
      %v798 = vsel %vm391, %v789, %v791
      %v799 = vsel %vm391, %v795, %v789
      %v800 = vmul.f32 %v799, %v399
      %v801 = vmul.f32 %v798, %v403
      %v802 = vmul.f32 %v797, %v407
      %v803 = vmul.f32 %v796, %v411
      %804 = vrot.lane.b32.xlu0 %v752, 1
      %v805 = vpop.permute.xlu0 %804
      %806 = vrot.lane.b32.xlu0 %v753, 1
      %v807 = vpop.permute.xlu0 %806
      %808 = vrot.lane.b32.xlu0 %v754, 1
      %v809 = vpop.permute.xlu0 %808
      %810 = vrot.lane.b32.xlu0 %v755, 1
      %v811 = vpop.permute.xlu0 %810
      %v812 = vsel %vm424, %v809, %v811
      %v813 = vsel %vm424, %v807, %v809
      %v814 = vsel %vm424, %v805, %v807
      %v815 = vsel %vm424, %v811, %v805
      %v816 = vmul.f32 %v815, %v432
      %v817 = vmul.f32 %v814, %v436
      %v818 = vmul.f32 %v813, %v440
      %v819 = vmul.f32 %v812, %v444
      %v820 = vmul.f32 %v752, %v452
      %v821 = vmul.f32 %v753, %v456
      %v822 = vmul.f32 %v754, %v460
      %v823 = vmul.f32 %v755, %v464
      %824 = vrot.lane.b32.xlu0 %v752, 127
      %v825 = vpop.permute.xlu0 %824
      %826 = vrot.lane.b32.xlu0 %v753, 127
      %v827 = vpop.permute.xlu0 %826
      %828 = vrot.lane.b32.xlu0 %v754, 127
      %v829 = vpop.permute.xlu0 %828
      %830 = vrot.lane.b32.xlu0 %v755, 127
      %v831 = vpop.permute.xlu0 %830
      %v832 = vsel %vm477, %v829, %v831
      %v833 = vsel %vm477, %v827, %v829
      %v834 = vsel %vm477, %v825, %v827
      %v835 = vsel %vm477, %v831, %v825
      %v836 = vmul.f32 %v834, %v485
      %v837 = vmul.f32 %v833, %v489
      %v838 = vmul.f32 %v832, %v493
      %v839 = vmul.f32 %v835, %v497
      %840 = vrot.lane.b32.xlu0 %v752, 113
      %v841 = vpop.permute.xlu0 %840
      %842 = vrot.lane.b32.xlu0 %v753, 113
      %v843 = vpop.permute.xlu0 %842
      %844 = vrot.lane.b32.xlu0 %v754, 113
      %v845 = vpop.permute.xlu0 %844
      %846 = vrot.lane.b32.xlu0 %v755, 113
      %v847 = vpop.permute.xlu0 %846
      %v848 = vsel %vm510, %v845, %v847
      %v849 = vsel %vm510, %v843, %v845
      %v850 = vsel %vm510, %v841, %v843
      %v851 = vsel %vm510, %v847, %v841
      %v852 = vmul.f32 %v850, %v518
      %v853 = vmul.f32 %v849, %v522
      %v854 = vmul.f32 %v848, %v526
      %v855 = vmul.f32 %v851, %v530
      %856 = vrot.lane.b32.xlu0 %v752, 112
      %v857 = vpop.permute.xlu0 %856
      %858 = vrot.lane.b32.xlu0 %v753, 112
      %v859 = vpop.permute.xlu0 %858
      %860 = vrot.lane.b32.xlu0 %v754, 112
      %v861 = vpop.permute.xlu0 %860
      %862 = vrot.lane.b32.xlu0 %v755, 112
      %v863 = vpop.permute.xlu0 %862
      %v864 = vsel %vm543, %v861, %v863
      %v865 = vsel %vm543, %v859, %v861
      %v866 = vsel %vm543, %v857, %v859
      %v867 = vsel %vm543, %v863, %v857
      %v868 = vmul.f32 %v866, %v551
      %v869 = vmul.f32 %v865, %v555
      %v870 = vmul.f32 %v864, %v559
      %v871 = vmul.f32 %v867, %v563
      %872 = vrot.lane.b32.xlu0 %v752, 111
      %v873 = vpop.permute.xlu0 %872
      %874 = vrot.lane.b32.xlu0 %v753, 111
      %v875 = vpop.permute.xlu0 %874
      %876 = vrot.lane.b32.xlu0 %v754, 111
      %v877 = vpop.permute.xlu0 %876
      %878 = vrot.lane.b32.xlu0 %v755, 111
      %v879 = vpop.permute.xlu0 %878
      %v880 = vsel %vm576, %v877, %v879
      %v881 = vsel %vm576, %v875, %v877
      %v882 = vsel %vm576, %v873, %v875
      %v883 = vsel %vm576, %v879, %v873
      %v884 = vmul.f32 %v882, %v584
      %v885 = vmul.f32 %v881, %v588
      %v886 = vmul.f32 %v880, %v592
      %v887 = vmul.f32 %v883, %v596
      %v888 = vpack.c.bf16 %v784, %v768
      %v889 = vpack.c.bf16 %v785, %v769
      %v890 = vpack.c.bf16 %v786, %v770
      %v891 = vpack.c.bf16 %v787, %v771
      %v892 = vpack.c.bf16 %v816, %v800
      %v893 = vpack.c.bf16 %v817, %v801
      %v894 = vpack.c.bf16 %v818, %v802
      %v895 = vpack.c.bf16 %v819, %v803
      %v896 = vpack.c.bf16 %v836, %v820
      %v897 = vpack.c.bf16 %v837, %v821
      %v898 = vpack.c.bf16 %v838, %v822
      %v899 = vpack.c.bf16 %v839, %v823
      %v900 = vpack.c.bf16 %v868, %v852
      %v901 = vpack.c.bf16 %v869, %v853
      %v902 = vpack.c.bf16 %v870, %v854
      %v903 = vpack.c.bf16 %v871, %v855
      %v904 = vpack.c.bf16 %v884, %v884
      %v905 = vpack.c.bf16 %v885, %v885
      %v906 = vpack.c.bf16 %v886, %v886
      %v907 = vpack.c.bf16 %v887, %v887
      %v908 = vld [vmem:[%s3] sm:$0xf]
      %v909 = vld [vmem:[%s4] sm:$0xff]
      %911 = vset.pattern.permute.xlu0 0
      %912 = vperm.xlu0 %911, %v909
      %v913 = vpop.permute.xlu0 %912
      %v916 = vsel %vm628, %v908, 0
      %v919 = vsel %vm632, %v904, 0
      %v922 = vsel %vm632, %v905, 0
      %v925 = vsel %vm632, %v906, 0
      %v928 = vsel %vm632, %v907, 0
      %930 = vmatprep.subr.bf16.mxu0 %v889
      %931 = vmatpush1.bf16.msra.mxu0 %v888
      %932 = vmatprep.subr.bf16.mxu0 %v893
      %933 = vmatpush1.bf16.msra.mxu0 %v892
      %934 = vmatprep.subr.bf16.mxu0 %v897
      %935 = vmatpush1.bf16.msra.mxu0 %v896
      %936 = vmatprep.subr.bf16.mxu0 %v901
      %937 = vmatpush1.bf16.msra.mxu0 %v900
      %938 = vmatprep.subr.bf16.mxu0 %v922
      %939 = vmatpush1.bf16.msra.mxu0 %v919
      %940 = vmatprep.subr.bf16.mxu0 0
      %941 = vmatpush1.bf16.msra.mxu0 0
      %942 = vmatprep.subr.bf16.mxu0 0
      %943 = vmatpush1.bf16.msra.mxu0 0
      %944 = vmatprep.subr.bf16.mxu0 0
      %945 = vmatpush1.bf16.msra.mxu0 0
      %946 = vmatprep.subr.bf16.mxu0 0
      %947 = vmatpush1.bf16.msra.mxu0 0
      %948 = vmatprep.subr.bf16.mxu0 0
      %949 = vmatpush1.bf16.msra.mxu0 0
      %950 = vmatprep.subr.bf16.mxu0 0
      %951 = vmatpush1.bf16.msra.mxu0 0
      %952 = vmatprep.subr.bf16.mxu0 0
      %953 = vmatpush1.bf16.msra.mxu0 0
      %954 = vmatprep.subr.bf16.mxu0 0
      %955 = vmatpush1.bf16.msra.mxu0 0
      %956 = vmatprep.subr.bf16.mxu0 0
      %957 = vmatpush1.bf16.msra.mxu0 0
      %958 = vmatprep.subr.bf16.mxu0 0
      %959 = vmatpush1.bf16.msra.mxu0 0
      %960 = vmatprep.subr.bf16.mxu0 0
      %961 = vmatpush1.bf16.msra.mxu0 0
      %962 = vmatprep.mubr.bf16.mxu0 0
      %963 = vmatmul.mubr.bf16.gmra.mrb[0].mxu0 %v916
      %v964 = vpop.f32.mrb[0].mxu0
      %v965 = vadd.f32 %v913, %v964
      %v966 = vpop.f32.mrb[0].mxu0
      %v967 = vadd.f32 %v913, %v966
      %v968 = vpop.f32.mrb[0].mxu0
      %v969 = vpop.f32.mrb[0].mxu0
      %970 = vdwg.mxu0
      %971 = vmatprep.subr.bf16.mxu0 %v891
      %972 = vmatpush1.bf16.msra.mxu0 %v890
      %973 = vmatprep.subr.bf16.mxu0 %v895
      %974 = vmatpush1.bf16.msra.mxu0 %v894
      %975 = vmatprep.subr.bf16.mxu0 %v899
      %976 = vmatpush1.bf16.msra.mxu0 %v898
      %977 = vmatprep.subr.bf16.mxu0 %v903
      %978 = vmatpush1.bf16.msra.mxu0 %v902
      %979 = vmatprep.subr.bf16.mxu0 %v928
      %980 = vmatpush1.bf16.msra.mxu0 %v925
      %981 = vmatprep.subr.bf16.mxu0 0
      %982 = vmatpush1.bf16.msra.mxu0 0
      %983 = vmatprep.subr.bf16.mxu0 0
      %984 = vmatpush1.bf16.msra.mxu0 0
      %985 = vmatprep.subr.bf16.mxu0 0
      %986 = vmatpush1.bf16.msra.mxu0 0
      %987 = vmatprep.subr.bf16.mxu0 0
      %988 = vmatpush1.bf16.msra.mxu0 0
      %989 = vmatprep.subr.bf16.mxu0 0
      %990 = vmatpush1.bf16.msra.mxu0 0
      %991 = vmatprep.subr.bf16.mxu0 0
      %992 = vmatpush1.bf16.msra.mxu0 0
      %993 = vmatprep.subr.bf16.mxu0 0
      %994 = vmatpush1.bf16.msra.mxu0 0
      %995 = vmatprep.subr.bf16.mxu0 0
      %996 = vmatpush1.bf16.msra.mxu0 0
      %997 = vmatprep.subr.bf16.mxu0 0
      %998 = vmatpush1.bf16.msra.mxu0 0
      %999 = vmatprep.subr.bf16.mxu0 0
      %1000 = vmatpush1.bf16.msra.mxu0 0
      %1001 = vmatprep.subr.bf16.mxu0 0
      %1002 = vmatpush1.bf16.msra.mxu0 0
      %1003 = vmatprep.mubr.bf16.mxu0 0
      %1004 = vmatmul.mubr.bf16.gmra.mrb[0].mxu0 %v916
      %v1005 = vpop.f32.mrb[0].mxu0
      %v1006 = vadd.f32 %v913, %v1005
      %v1007 = vpop.f32.mrb[0].mxu0
      %v1008 = vadd.f32 %v913, %v1007
      %v1009 = vpop.f32.mrb[0].mxu0
      %v1010 = vpop.f32.mrb[0].mxu0
      %1011 = vdwg.mxu0
      %v1012 = vmax.f32 %v965, 0.0
      %v1013 = vmax.f32 %v967, 0.0
      %v1014 = vmax.f32 %v1006, 0.0
      %v1015 = vmax.f32 %v1008, 0.0
      %v1016 = vmul.f32 %v1012, %v735
      %v1017 = vmul.f32 %v1013, %v739
      %v1018 = vmul.f32 %v1014, %v743
      %v1019 = vmul.f32 %v1015, %v747
      %1020 = vst [vmem:[%s299] sm:$0xff] %v1016
      %1021 = vst [vmem:[%s299 + $0x8] sm:$0xff] %v1017
      %1022 = vst [vmem:[%s299 + $0x10] sm:$0xff] %v1018
      %1023 = vst [vmem:[%s299 + $0x18] sm:$0xff] %v1019
      %s1024 = smul.u32 4, %s18
      %p1025 = scmp.lt.s32.totalorder %s1024, 7
      %s1026 = scalar_select %p1025, %s1024, 7
      %s1027 = smul.addr %s1026, 8
      %s1028 = scalar_lea.vmem %s7, %s1027
      // Predicated region
      $region49: #{neck_forward.1} parent=47 // pred_check
        %p1029 = pneg %p193
      $region50: #{neck_forward.1} parent=47 // pred_check_branch
        %1031 = sbr.rel (%p1029) target = $region52
      $region51: #{neck_forward.1} parent=47 // pred_region
        %s1032 = smul.u32 4, %s18
      $region52: #{neck_forward.1} parent=47 // pred_fallthru
        _
    $region48: #{neck_forward.1} parent=5 // pred_fallthru
      _
    %p1033 = scmp.le.s32.totalorder 2, %s13
    // Predicated region
    $region53: #{neck_forward.1} parent=5 // pred_check
      %p1034 = pneg %p1033
    $region54: #{neck_forward.1} parent=5 // pred_check_branch
      %1036 = sbr.rel (%p1034) target = $region56
    $region55: #{neck_forward.1} parent=5 // pred_region
      %s1037 = ssub.s32 %s13, 2
      // Predicated region
      $region57: #{neck_forward.1} parent=55 // pred_check
        %p1038 = pneg %p199
      $region58: #{neck_forward.1} parent=55 // pred_check_branch
        %1040 = sbr.rel (%p1038) target = $region60
      $region59: #{neck_forward.1} parent=55 // pred_region
        %s1041 = smul.u32 4, %s19
        %p1042 = scmp.lt.s32.totalorder %s1041, 7
        %s1043 = scalar_select %p1042, %s1041, 7
        %s1044 = smul.addr %s1043, 8
        %s1045 = scalar_lea.vmem %s7, %s1044
      $region60: #{neck_forward.1} parent=55 // pred_fallthru
        _
    $region56: #{neck_forward.1} parent=5 // pred_fallthru
      _
  $region6: #{neck_forward.1} parent=0 // loop_footer
    %s17 = sadd.s32 1, %s13
  $region7: #{neck_forward.1} parent=0 // loop_footer_branch
    %12 = sbr.rel target = $region3
  $region8: #{neck_forward.1} parent=0 // loop_exit
    _

</llo_original>
